<compile_context>
chip_gen: v7x
topology: tpu7x:2x2x1
jax: 0.10.0
libtpu: 0.0.40
codegen_flags: <defaults>
</compile_context>

<pallas_src>
import math

import jax
import jax.numpy as jnp
from jax import lax
from jax.experimental import pallas as pl
from jax.experimental.pallas import tpu as pltpu


def _round_up(x, m):
    return ((x + m - 1) // m) * m


# ----------------------------------------------------------------------------
# Kernels (weights are stored pre-transposed as (in, out))
# ----------------------------------------------------------------------------
def _noisy_linear_kernel(x_ref, wmu_ref, wsig_ref, eps_in_ref, eps_out_ref,
                         bmu_ref, bsig_ref, beps_ref, o_ref):
    k = pl.program_id(2)

    @pl.when(k == 0)
    def _():
        o_ref[...] = jnp.zeros_like(o_ref)

    # Factorized-noise weight mix on the VPU, in f32 (bf16 params promote to f32):
    #   W^T_tile = mu^T + sigma^T * (eps_in . eps_out^T)        # (tk, tn)
    w = wmu_ref[...] + wsig_ref[...] * (eps_in_ref[...] * eps_out_ref[...])
    w = w.astype(x_ref.dtype)

    # Canonical x @ W^T layout: contract dim1(x) with dim0(W^T) -> no transpose,
    # lane-dense (tm, tn) result, f32 accumulation directly into the resident output.
    o_ref[...] += lax.dot_general(
        x_ref[...], w, dimension_numbers=(((1,), (0,)), ((), ())),
        preferred_element_type=jnp.float32)

    @pl.when(k == pl.num_programs(2) - 1)
    def _():
        o_ref[...] += bmu_ref[...] + bsig_ref[...] * beps_ref[...]     # (1, tn) bcast


def _plain_linear_kernel(x_ref, w_ref, b_ref, o_ref):
    k = pl.program_id(2)

    @pl.when(k == 0)
    def _():
        o_ref[...] = jnp.zeros_like(o_ref)

    o_ref[...] += lax.dot_general(
        x_ref[...], w_ref[...], dimension_numbers=(((1,), (0,)), ((), ())),
        preferred_element_type=jnp.float32)

    @pl.when(k == pl.num_programs(2) - 1)
    def _():
        o_ref[...] += b_ref[...]


# ----------------------------------------------------------------------------
# One-time parameter preparation (OUT of the per-forward hot path)
# ----------------------------------------------------------------------------
def prepare_noisy_linear(params, *, matmul_dtype=jnp.bfloat16, fuse_noise=True,
                         tm=256, tn=256, tk=1024):
    """Pad, transpose and (optionally) down-cast the NoisyLinear parameters once.

    Call this at init / reset_noise / parameter-update time; the returned dict is
    what noisy_linear_forward consumes on every step.
    """
    out_f, in_f = params["weight_mu"].shape

    tn_c = min(tn, _round_up(out_f, 128))
    tk_c = min(tk, _round_up(in_f, 128))
    Op = _round_up(out_f, tn_c)
    Ip = _round_up(in_f, tk_c)

    def pad2(a, r, c, dtype):
        a = a.astype(jnp.float32)
        a = jnp.pad(a, ((0, r - a.shape[0]), (0, c - a.shape[1])))
        return a.astype(dtype)

    prep = {
        "in_features": in_f, "out_features": out_f,
        "Ip": Ip, "Op": Op, "tm": tm, "tn": tn_c, "tk": tk_c,
        "matmul_dtype": matmul_dtype, "fuse_noise": bool(fuse_noise),
        # (in, out) layouts so the kernel contracts dim1(x) with dim0(W^T).
        "wmu_t": pad2(params["weight_mu"].T, Ip, Op, matmul_dtype),
        "bias_mu": pad2(params["bias_mu"].reshape(1, out_f), 1, Op, jnp.float32),
    }

    if fuse_noise:
        prep["wsig_t"] = pad2(params["weight_sigma"].T, Ip, Op, matmul_dtype)
        prep["eps_in"] = pad2(params["eps_in"].reshape(in_f, 1), Ip, 1, jnp.float32)
        prep["eps_out"] = pad2(params["eps_out"].reshape(1, out_f), 1, Op, jnp.float32)
        prep["bias_sigma"] = pad2(params["bias_sigma"].reshape(1, out_f), 1, Op, jnp.float32)
        prep["bias_epsilon"] = pad2(params["bias_epsilon"].reshape(1, out_f), 1, Op, jnp.float32)
    else:
        # Noise held fixed across many forwards: precompute the noisy W once here,
        # hot path then streams a single weight array (half the weight HBM traffic).
        w_noisy = (params["weight_mu"]
                   + params["weight_sigma"] * jnp.outer(params["eps_out"], params["eps_in"]))
        b_noisy = params["bias_mu"] + params["bias_sigma"] * params["bias_epsilon"]
        prep["w_noisy_t"] = pad2(w_noisy.T, Ip, Op, matmul_dtype)
        prep["b_noisy"] = pad2(b_noisy.reshape(1, out_f), 1, Op, jnp.float32)

    return prep


# ----------------------------------------------------------------------------
# Hot-path forward
# ----------------------------------------------------------------------------
def noisy_linear_forward(x, prep, *, training=True):
    """y = x @ (mu + sigma*eps)^T + (bmu + bsig*beps)   (training), or mu/bmu (eval)."""
    B, in_f = x.shape
    assert in_f == prep["in_features"]
    out_f, Ip, Op = prep["out_features"], prep["Ip"], prep["Op"]
    tn, tk = prep["tn"], prep["tk"]
    mdtype = prep["matmul_dtype"]

    # Batch tiling: single tile for typical batches (no redundant noise-mix work).
    tm = min(prep["tm"], _round_up(B, 8))
    Bp = _round_up(B, tm)
    grid_i = Bp // tm

    # If the batch axis has only one program, split the out axis so a "parallel"
    # grid axis has >=2 programs (keeps both v7x TensorCores busy; negligible
    # extra per-step overhead on single-TC v5e/v6e).
    tn_eff = tn
    if grid_i == 1 and tn >= 256:
        tn_eff = tn // 2
    grid_j = Op // tn_eff
    grid_k = Ip // tk
    grid = (grid_i, grid_j, grid_k)

    # Only x is padded / down-cast per call (weights were prepared once).
    xp = jnp.pad(x.astype(mdtype), ((0, Bp - B), (0, Ip - in_f)))

    x_spec = pl.BlockSpec((tm, tk), lambda i, j, k: (i, k))
    w_spec = pl.BlockSpec((tk, tn_eff), lambda i, j, k: (k, j))
    ei_spec = pl.BlockSpec((tk, 1), lambda i, j, k: (k, 0))
    eo_spec = pl.BlockSpec((1, tn_eff), lambda i, j, k: (0, j))
    b_spec = pl.BlockSpec((1, tn_eff), lambda i, j, k: (0, j))
    out_spec = pl.BlockSpec((tm, tn_eff), lambda i, j, k: (i, j))

    out_shape = jax.ShapeDtypeStruct((Bp, Op), jnp.float32)   # f32 resident accumulator

    compiler_params = pltpu.CompilerParams(
        dimension_semantics=("parallel", "parallel", "arbitrary"),
        vmem_limit_bytes=48 * 1024 * 1024)

    fused = training and prep["fuse_noise"]
    itemsize = jnp.dtype(mdtype).itemsize
    n_w = 2 if fused else 1
    cost = pl.CostEstimate(
        flops=2 * Bp * Ip * Op,
        transcendentals=0,
        bytes_accessed=(grid_j * Bp * Ip * itemsize            # x re-read per out tile
                        + grid_i * n_w * Op * Ip * itemsize    # weights re-read per batch tile
                        + Bp * Op * 4                          # output
                        + grid_i * grid_j * 4 * (tk + 4 * tn_eff)))  # eps / bias

    if fused:
        yp = pl.pallas_call(
            _noisy_linear_kernel,
            out_shape=out_shape,
            grid=grid,
            in_specs=[x_spec, w_spec, w_spec, ei_spec, eo_spec,
                      b_spec, b_spec, b_spec],
            out_specs=out_spec,
            compiler_params=compiler_params,
            cost_estimate=cost,
        )(xp, prep["wmu_t"], prep["wsig_t"], prep["eps_in"], prep["eps_out"],
          prep["bias_mu"], prep["bias_sigma"], prep["bias_epsilon"])
    elif training:
        yp = pl.pallas_call(
            _plain_linear_kernel,
            out_shape=out_shape,
            grid=grid,
            in_specs=[x_spec, w_spec, b_spec],
            out_specs=out_spec,
            compiler_params=compiler_params,
            cost_estimate=cost,
        )(xp, prep["w_noisy_t"], prep["b_noisy"])
    else:
        yp = pl.pallas_call(
            _plain_linear_kernel,
            out_shape=out_shape,
            grid=grid,
            in_specs=[x_spec, w_spec, b_spec],
            out_specs=out_spec,
            compiler_params=compiler_params,
            cost_estimate=cost,
        )(xp, prep["wmu_t"], prep["bias_mu"])

    return yp[:B, :out_f].astype(x.dtype)


# ----------------------------------------------------------------------------
# Deterministic parameter / noise initialization (mirrors the PyTorch __init__)
# ----------------------------------------------------------------------------
def _scale_noise(key, size):
    # f(x) = sign(x) * sqrt(|x|)
    x = jax.random.normal(key, (size,), dtype=jnp.float32)
    return jnp.sign(x) * jnp.sqrt(jnp.abs(x))


def init_noisy_linear(key, in_features, out_features, std_init=0.4):
    k_wmu, k_bmu, k_ein, k_eout, k_beps = jax.random.split(key, 5)
    mu_range = 1.0 / math.sqrt(in_features)

    weight_mu = jax.random.uniform(
        k_wmu, (out_features, in_features), jnp.float32, -mu_range, mu_range)
    weight_sigma = jnp.full((out_features, in_features),
                            std_init / math.sqrt(in_features), jnp.float32)
    bias_mu = jax.random.uniform(
        k_bmu, (out_features,), jnp.float32, -mu_range, mu_range)
    bias_sigma = jnp.full((out_features,),
                          std_init / math.sqrt(out_features), jnp.float32)

    # reset_noise(): factorized Gaussian noise
    eps_in = _scale_noise(k_ein, in_features)
    eps_out = _scale_noise(k_eout, out_features)
    weight_epsilon = jnp.outer(eps_out, eps_in)   # epsilon_out.ger(epsilon_in)
    bias_epsilon = _scale_noise(k_beps, out_features)

    return {
        "weight_mu": weight_mu,
        "weight_sigma": weight_sigma,
        "weight_epsilon": weight_epsilon,   # kept only for the pure-JAX reference
        "eps_in": eps_in,                   # factorized noise used by the kernel
        "eps_out": eps_out,
        "bias_mu": bias_mu,
        "bias_sigma": bias_sigma,
        "bias_epsilon": bias_epsilon,
    }


def _reference_forward(x, p, training=True):
    if training:
        w = p["weight_mu"] + p["weight_sigma"] * p["weight_epsilon"]
        b = p["bias_mu"] + p["bias_sigma"] * p["bias_epsilon"]
    else:
        w, b = p["weight_mu"], p["bias_mu"]
    return jnp.dot(x, w.T, precision=lax.Precision.HIGHEST) + b


if __name__ == "__main__":
    key = jax.random.PRNGKey(0)
    k_param, k_x, k_param2, k_x2 = jax.random.split(key, 4)

    # --- small case (matches the module's typical MLP layer) --------------------
    batch, in_features, out_features = 8, 32, 64
    params = init_noisy_linear(k_param, in_features, out_features, std_init=0.4)
    x = jax.random.normal(k_x, (batch, in_features), dtype=jnp.float32)

    ref_train = _reference_forward(x, params, training=True)
    ref_eval = _reference_forward(x, params, training=False)

    # One-time prep (out of the per-call hot path): bf16 + f32 variants,
    # plus the precomputed-noisy-W variant (noise fixed across many forwards).
    prep_bf16 = prepare_noisy_linear(params, matmul_dtype=jnp.bfloat16, fuse_noise=True)
    prep_f32 = prepare_noisy_linear(params, matmul_dtype=jnp.float32, fuse_noise=True)
    prep_pre = prepare_noisy_linear(params, matmul_dtype=jnp.float32, fuse_noise=False)

    y_bf16 = jax.block_until_ready(noisy_linear_forward(x, prep_bf16, training=True))
    y_f32 = jax.block_until_ready(noisy_linear_forward(x, prep_f32, training=True))
    y_pre = jax.block_until_ready(noisy_linear_forward(x, prep_pre, training=True))
    y_eval = jax.block_until_ready(noisy_linear_forward(x, prep_f32, training=False))

    assert y_bf16.shape == (batch, out_features)
    assert jnp.allclose(y_f32, ref_train, atol=1e-4, rtol=1e-4)
    assert jnp.allclose(y_pre, ref_train, atol=1e-4, rtol=1e-4)
    assert jnp.allclose(y_bf16, ref_train, atol=3e-2, rtol=3e-2)
    assert jnp.allclose(y_eval, ref_eval, atol=1e-4, rtol=1e-4)

    # --- non-aligned, multi-tile case (exercises k-accumulation, padding, slicing) --
    b2, i2, o2 = 48, 200, 300
    params2 = init_noisy_linear(k_param2, i2, o2, std_init=0.4)
    x2 = jax.random.normal(k_x2, (b2, i2), dtype=jnp.float32)
    prep2 = prepare_noisy_linear(params2, matmul_dtype=jnp.float32, fuse_noise=True,
                                 tm=32, tn=128, tk=128)   # forces a (2, 3, 2) grid
    y2 = jax.block_until_ready(noisy_linear_forward(x2, prep2, training=True))
    ref2 = _reference_forward(x2, params2, training=True)
    assert jnp.allclose(y2, ref2, atol=1e-4, rtol=1e-4)

    print("KERNEL_OK")
</pallas_src>

<mosaic_0001>
module attributes {stable_mosaic.version = 11 : i64} {
  func.func @_noisy_linear_kernel(%arg0: i32, %arg1: i32, %arg2: i32, %arg3: memref<8x128xbf16, #tpu.memory_space<vmem>>, %arg4: memref<128x128xbf16, #tpu.memory_space<vmem>>, %arg5: memref<128x128xbf16, #tpu.memory_space<vmem>>, %arg6: memref<128x1xf32, #tpu.memory_space<vmem>>, %arg7: memref<1x128xf32, #tpu.memory_space<vmem>>, %arg8: memref<1x128xf32, #tpu.memory_space<vmem>>, %arg9: memref<1x128xf32, #tpu.memory_space<vmem>>, %arg10: memref<1x128xf32, #tpu.memory_space<vmem>>, %arg11: memref<8x128xf32, #tpu.memory_space<vmem>>) attributes {dimension_semantics = [#tpu.dimension_semantics<parallel>, #tpu.dimension_semantics<parallel>, #tpu.dimension_semantics<arbitrary>], iteration_bounds = array<i64: 1, 1, 1>, scalar_prefetch = 0 : i64, scratch_operands = 0 : i64, tpu.core_type = #tpu.core_type<tc>, window_params = [{transform_indices = @transform_0, window_bounds = array<i64: 8, 128>}, {transform_indices = @transform_1, window_bounds = array<i64: 128, 128>}, {transform_indices = @transform_2, window_bounds = array<i64: 128, 128>}, {transform_indices = @transform_3, window_bounds = array<i64: 128, 1>}, {transform_indices = @transform_4, window_bounds = array<i64: 1, 128>}, {transform_indices = @transform_5, window_bounds = array<i64: 1, 128>}, {transform_indices = @transform_6, window_bounds = array<i64: 1, 128>}, {transform_indices = @transform_7, window_bounds = array<i64: 1, 128>}, {transform_indices = @transform_8, window_bounds = array<i64: 8, 128>}]} {
    %c0_i32 = arith.constant 0 : i32
    %0 = arith.cmpi eq, %arg2, %c0_i32 : i32
    %1 = arith.extui %0 : i1 to i32
    %c0_i32_0 = arith.constant 0 : i32
    %2 = arith.cmpi ne, %1, %c0_i32_0 : i32
    scf.if %2 {
      %cst_16 = arith.constant 0.000000e+00 : f32
      %23 = vector.broadcast %cst_16 : f32 to vector<8x128xf32>
      %c0_17 = arith.constant 0 : index
      %c0_18 = arith.constant 0 : index
      %24 = vector.load %arg11[%c0_17, %c0_18] : memref<8x128xf32, #tpu.memory_space<vmem>>, vector<8x128xf32>
      tpu.vector_store %arg11[%c0_17, %c0_18], %23 {strides = array<i32>} : memref<8x128xf32, #tpu.memory_space<vmem>>, vector<8x128xf32>,
    } else {
    }
    %c0 = arith.constant 0 : index
    %c0_1 = arith.constant 0 : index
    %3 = vector.load %arg4[%c0, %c0_1] : memref<128x128xbf16, #tpu.memory_space<vmem>>, vector<128x128xbf16>
    %c0_2 = arith.constant 0 : index
    %c0_3 = arith.constant 0 : index
    %4 = vector.load %arg5[%c0_2, %c0_3] : memref<128x128xbf16, #tpu.memory_space<vmem>>, vector<128x128xbf16>
    %c0_4 = arith.constant 0 : index
    %c0_5 = arith.constant 0 : index
    %5 = vector.load %arg6[%c0_4, %c0_5] : memref<128x1xf32, #tpu.memory_space<vmem>>, vector<128x1xf32>
    %c0_6 = arith.constant 0 : index
    %c0_7 = arith.constant 0 : index
    %6 = vector.load %arg7[%c0_6, %c0_7] : memref<1x128xf32, #tpu.memory_space<vmem>>, vector<1x128xf32>
    %7 = vector.broadcast %5 : vector<128x1xf32> to vector<128x128xf32>
    %8 = vector.broadcast %6 : vector<1x128xf32> to vector<128x128xf32>
    %9 = arith.mulf %7, %8 : vector<128x128xf32>
    %10 = arith.extf %4 : vector<128x128xbf16> to vector<128x128xf32>
    %11 = arith.mulf %10, %9 : vector<128x128xf32>
    %12 = arith.extf %3 : vector<128x128xbf16> to vector<128x128xf32>
    %13 = arith.addf %12, %11 : vector<128x128xf32>
    %14 = arith.truncf %13 : vector<128x128xf32> to vector<128x128xbf16>
    %c0_8 = arith.constant 0 : index
    %c0_9 = arith.constant 0 : index
    %15 = vector.load %arg11[%c0_8, %c0_9] : memref<8x128xf32, #tpu.memory_space<vmem>>, vector<8x128xf32>
    %c0_10 = arith.constant 0 : index
    %c0_11 = arith.constant 0 : index
    %16 = vector.load %arg3[%c0_10, %c0_11] : memref<8x128xbf16, #tpu.memory_space<vmem>>, vector<8x128xbf16>
    %cst = arith.constant dense<0.000000e+00> : vector<8x128xf32>
    %17 = tpu.matmul %16, %14, %cst {dimension_numbers = #tpu.dot_dimension_numbers<[1], [0], [0], [1], [0, 0, 1, 1], [], []>} : vector<8x128xbf16>, vector<128x128xbf16>, vector<8x128xf32> -> vector<8x128xf32>
    %18 = arith.addf %15, %17 : vector<8x128xf32>
    %c0_12 = arith.constant 0 : index
    %c0_13 = arith.constant 0 : index
    %19 = vector.load %arg11[%c0_12, %c0_13] : memref<8x128xf32, #tpu.memory_space<vmem>>, vector<8x128xf32>
    tpu.vector_store %arg11[%c0_12, %c0_13], %18 {strides = array<i32>} : memref<8x128xf32, #tpu.memory_space<vmem>>, vector<8x128xf32>,
    %c0_i32_14 = arith.constant 0 : i32
    %20 = arith.cmpi eq, %arg2, %c0_i32_14 : i32
    %21 = arith.extui %20 : i1 to i32
    %c0_i32_15 = arith.constant 0 : i32
    %22 = arith.cmpi ne, %21, %c0_i32_15 : i32
    scf.if %22 {
      %c0_16 = arith.constant 0 : index
      %c0_17 = arith.constant 0 : index
      %23 = vector.load %arg11[%c0_16, %c0_17] : memref<8x128xf32, #tpu.memory_space<vmem>>, vector<8x128xf32>
      %c0_18 = arith.constant 0 : index
      %c0_19 = arith.constant 0 : index
      %24 = vector.load %arg8[%c0_18, %c0_19] : memref<1x128xf32, #tpu.memory_space<vmem>>, vector<1x128xf32>
      %c0_20 = arith.constant 0 : index
      %c0_21 = arith.constant 0 : index
      %25 = vector.load %arg9[%c0_20, %c0_21] : memref<1x128xf32, #tpu.memory_space<vmem>>, vector<1x128xf32>
      %c0_22 = arith.constant 0 : index
      %c0_23 = arith.constant 0 : index
      %26 = vector.load %arg10[%c0_22, %c0_23] : memref<1x128xf32, #tpu.memory_space<vmem>>, vector<1x128xf32>
      %27 = arith.mulf %25, %26 : vector<1x128xf32>
      %28 = arith.addf %24, %27 : vector<1x128xf32>
      %29 = vector.broadcast %28 : vector<1x128xf32> to vector<8x128xf32>
      %30 = arith.addf %23, %29 : vector<8x128xf32>
      %c0_24 = arith.constant 0 : index
      %c0_25 = arith.constant 0 : index
      %31 = vector.load %arg11[%c0_24, %c0_25] : memref<8x128xf32, #tpu.memory_space<vmem>>, vector<8x128xf32>
      tpu.vector_store %arg11[%c0_24, %c0_25], %30 {strides = array<i32>} : memref<8x128xf32, #tpu.memory_space<vmem>>, vector<8x128xf32>,
    } else {
    }
    return
  }
  func.func @transform_0(%arg0: i32, %arg1: i32, %arg2: i32) -> (i32, i32) {
    %c0_i32 = arith.constant 0 : i32
    return %arg0, %arg2 : i32, i32
  }
  func.func @transform_1(%arg0: i32, %arg1: i32, %arg2: i32) -> (i32, i32) {
    %c0_i32 = arith.constant 0 : i32
    return %arg2, %arg1 : i32, i32
  }
  func.func @transform_2(%arg0: i32, %arg1: i32, %arg2: i32) -> (i32, i32) {
    %c0_i32 = arith.constant 0 : i32
    return %arg2, %arg1 : i32, i32
  }
  func.func @transform_3(%arg0: i32, %arg1: i32, %arg2: i32) -> (i32, i32) {
    %c0_i32 = arith.constant 0 : i32
    %c0_i32_0 = arith.constant 0 : i32
    return %arg2, %c0_i32 : i32, i32
  }
  func.func @transform_4(%arg0: i32, %arg1: i32, %arg2: i32) -> (i32, i32) {
    %c0_i32 = arith.constant 0 : i32
    %c0_i32_0 = arith.constant 0 : i32
    return %c0_i32, %arg1 : i32, i32
  }
  func.func @transform_5(%arg0: i32, %arg1: i32, %arg2: i32) -> (i32, i32) {
    %c0_i32 = arith.constant 0 : i32
    %c0_i32_0 = arith.constant 0 : i32
    return %c0_i32, %arg1 : i32, i32
  }
  func.func @transform_6(%arg0: i32, %arg1: i32, %arg2: i32) -> (i32, i32) {
    %c0_i32 = arith.constant 0 : i32
    %c0_i32_0 = arith.constant 0 : i32
    return %c0_i32, %arg1 : i32, i32
  }
  func.func @transform_7(%arg0: i32, %arg1: i32, %arg2: i32) -> (i32, i32) {
    %c0_i32 = arith.constant 0 : i32
    %c0_i32_0 = arith.constant 0 : i32
    return %c0_i32, %arg1 : i32, i32
  }
  func.func @transform_8(%arg0: i32, %arg1: i32, %arg2: i32) -> (i32, i32) {
    %c0_i32 = arith.constant 0 : i32
    return %arg0, %arg1 : i32, i32
  }
}

</mosaic_0001>

<llo_original>
// kernel: tpu_custom_call.1
$region0: #{tpu_custom_call.1}
  #allocation0 [shape = 'u32[]', space=smem, size = 0x4, offset = 0x4, fixed_abs, tag = 'smem constant byte address 0x4 - core index']
  #allocation1 [shape = 'u32[144,128]{1,0:T(1,128)}', space=vmem, size = 0x12000, scoped, tag = 'internal scratch']
  %s0 = inlined_call_operand.hbm [shape: bf16[8,128], index: 0, kind: input, shape index: {}]
  %s1 = inlined_call_operand.vmem [shape: bf16[128,128], index: 1, kind: input, shape index: {}]
  %s2 = inlined_call_operand.vmem [shape: bf16[128,128], index: 2, kind: input, shape index: {}]
  %s3 = inlined_call_operand.vmem [shape: f32[128,1], index: 3, kind: input, shape index: {}]
  %s4 = inlined_call_operand.vmem [shape: f32[1,128], index: 4, kind: input, shape index: {}]
  %s5 = inlined_call_operand.vmem [shape: f32[1,128], index: 5, kind: input, shape index: {}]
  %s6 = inlined_call_operand.vmem [shape: f32[1,128], index: 6, kind: input, shape index: {}]
  %s7 = inlined_call_operand.vmem [shape: f32[1,128], index: 7, kind: input, shape index: {}]
  %s8 = inlined_call_operand.hbm [shape: f32[8,128], index: 8, kind: output, shape index: {}]
  %s9 = sld [smem:[#allocation0]]
  $region54: #{tpu_custom_call.1} parent=0
    _
  %s11 = ssub.s32 1, %s9
  %s12 = scalar_select 0, %s11, %s9
  $region1: #{tpu_custom_call.1} parent=0
    #allocation2 [shape = 'u8[2048]{0}', space=vmem, size = 0x800, scoped, tag = 'input window, operand 0, single buffered']
    #allocation3 [shape = 's32[1]{0}', space=sflag, size = 0x4, scoped, tag = 'scoped memory for tpu_custom_call.1']
    #allocation4 [shape = 's32[1]{0}', space=sflag, size = 0x4, scoped, tag = 'scoped memory for tpu_custom_call.1']
    #allocation5 [shape = 'u8[4096]{0}', space=vmem, size = 0x1000, scoped, tag = 'output window, operand 0, single buffered']
    %13 = vsyncpa [#allocation3], 0
    %14 = vsyncpa [#allocation4], 0
    // Predicated region
    $region2: #{tpu_custom_call.1} parent=1 // pred_check
      _
    $region3: #{tpu_custom_call.1} parent=1 // pred_check_branch
      %16 = sbr.rel (0) target = $region5
    $region4: #{tpu_custom_call.1} parent=1 // pred_region
      %s18 = ssub.s32 64, 64
      %19 = vsyncadd [#allocation3], %s18
      %s21 = sshll.u32 [#allocation2], 4
      %s22 = int_to_ptr.vmem [resolvable:$true] %s21
      %24 = dma.hbm_to_vmem [thread:$0]  %s0, 64, %s22, [#allocation3]
    $region5: #{tpu_custom_call.1} parent=1 // pred_fallthru
      _
    // Predicated region
    $region6: #{tpu_custom_call.1} parent=1 // pred_check
      _
    $region7: #{tpu_custom_call.1} parent=1 // pred_check_branch
      %26 = sbr.rel (0) target = $region9
    $region8: #{tpu_custom_call.1} parent=1 // pred_region
      _
    $region9: #{tpu_custom_call.1} parent=1 // pred_fallthru
      _
    // Predicated region
    $region10: #{tpu_custom_call.1} parent=1 // pred_check
      _
    $region11: #{tpu_custom_call.1} parent=1 // pred_check_branch
      %28 = sbr.rel (0) target = $region13
    $region12: #{tpu_custom_call.1} parent=1 // pred_region
      _
    $region13: #{tpu_custom_call.1} parent=1 // pred_fallthru
      _
    // Predicated region
    $region14: #{tpu_custom_call.1} parent=1 // pred_check
      _
    $region15: #{tpu_custom_call.1} parent=1 // pred_check_branch
      %30 = sbr.rel (0) target = $region17
    $region16: #{tpu_custom_call.1} parent=1 // pred_region
      _
    $region17: #{tpu_custom_call.1} parent=1 // pred_fallthru
      _
    // Predicated region
    $region18: #{tpu_custom_call.1} parent=1 // pred_check
      _
    $region19: #{tpu_custom_call.1} parent=1 // pred_check_branch
      %32 = sbr.rel (0) target = $region21
    $region20: #{tpu_custom_call.1} parent=1 // pred_region
      _
    $region21: #{tpu_custom_call.1} parent=1 // pred_fallthru
      _
    // Predicated region
    $region22: #{tpu_custom_call.1} parent=1 // pred_check
      _
    $region23: #{tpu_custom_call.1} parent=1 // pred_check_branch
      %34 = sbr.rel (0) target = $region25
    $region24: #{tpu_custom_call.1} parent=1 // pred_region
      _
    $region25: #{tpu_custom_call.1} parent=1 // pred_fallthru
      _
    // Predicated region
    $region26: #{tpu_custom_call.1} parent=1 // pred_check
      _
    $region27: #{tpu_custom_call.1} parent=1 // pred_check_branch
      %36 = sbr.rel (0) target = $region29
    $region28: #{tpu_custom_call.1} parent=1 // pred_region
      _
    $region29: #{tpu_custom_call.1} parent=1 // pred_fallthru
      _
    // Predicated region
    $region30: #{tpu_custom_call.1} parent=1 // pred_check
      _
    $region31: #{tpu_custom_call.1} parent=1 // pred_check_branch
      %38 = sbr.rel (0) target = $region33
    $region32: #{tpu_custom_call.1} parent=1 // pred_region
      _
    $region33: #{tpu_custom_call.1} parent=1 // pred_fallthru
      _
    // Predicated region
    $region34: #{tpu_custom_call.1} parent=1 // pred_check
      _
    $region35: #{tpu_custom_call.1} parent=1 // pred_check_branch
      %40 = sbr.rel (0) target = $region37
    $region36: #{tpu_custom_call.1} parent=1 // pred_region
      %41 = dma.done [#allocation3], 64
    $region37: #{tpu_custom_call.1} parent=1 // pred_fallthru
      _
    %p43 = scmp.eq.s32.totalorder 0, 0
    // Predicated region
    $region38: #{tpu_custom_call.1} parent=1 // pred_check
      %p44 = pneg %p43
    $region39: #{tpu_custom_call.1} parent=1 // pred_check_branch
      %46 = sbr.rel (%p44) target = $region41
    $region40: #{tpu_custom_call.1} parent=1 // pred_region
      %47 = vst [vmem:[#allocation5] sm:$0xff] 0.0
    $region41: #{tpu_custom_call.1} parent=1 // pred_fallthru
      _
    %v48 = vld [vmem:[%s1] sm:$0xf]
    %v49 = vld [vmem:[%s1 + $0x4] sm:$0xf]
    %v50 = vld [vmem:[%s1 + $0x8] sm:$0xf]
    %v51 = vld [vmem:[%s1 + $0xc] sm:$0xf]
    %v52 = vld [vmem:[%s1 + $0x10] sm:$0xf]
    %v53 = vld [vmem:[%s1 + $0x14] sm:$0xf]
    %v54 = vld [vmem:[%s1 + $0x18] sm:$0xf]
    %v55 = vld [vmem:[%s1 + $0x1c] sm:$0xf]
    %v56 = vld [vmem:[%s1 + $0x20] sm:$0xf]
    %v57 = vld [vmem:[%s1 + $0x24] sm:$0xf]
    %v58 = vld [vmem:[%s1 + $0x28] sm:$0xf]
    %v59 = vld [vmem:[%s1 + $0x2c] sm:$0xf]
    %v60 = vld [vmem:[%s1 + $0x30] sm:$0xf]
    %v61 = vld [vmem:[%s1 + $0x34] sm:$0xf]
    %v62 = vld [vmem:[%s1 + $0x38] sm:$0xf]
    %v63 = vld [vmem:[%s1 + $0x3c] sm:$0xf]
    %v64 = vld [vmem:[%s2] sm:$0xf]
    %v65 = vld [vmem:[%s2 + $0x4] sm:$0xf]
    %v66 = vld [vmem:[%s2 + $0x8] sm:$0xf]
    %v67 = vld [vmem:[%s2 + $0xc] sm:$0xf]
    %v68 = vld [vmem:[%s2 + $0x10] sm:$0xf]
    %v69 = vld [vmem:[%s2 + $0x14] sm:$0xf]
    %v70 = vld [vmem:[%s2 + $0x18] sm:$0xf]
    %v71 = vld [vmem:[%s2 + $0x1c] sm:$0xf]
    %v72 = vld [vmem:[%s2 + $0x20] sm:$0xf]
    %v73 = vld [vmem:[%s2 + $0x24] sm:$0xf]
    %v74 = vld [vmem:[%s2 + $0x28] sm:$0xf]
    %v75 = vld [vmem:[%s2 + $0x2c] sm:$0xf]
    %v76 = vld [vmem:[%s2 + $0x30] sm:$0xf]
    %v77 = vld [vmem:[%s2 + $0x34] sm:$0xf]
    %v78 = vld [vmem:[%s2 + $0x38] sm:$0xf]
    %v79 = vld [vmem:[%s2 + $0x3c] sm:$0xf]
    %v80 = vld [vmem:[%s3] sm:$0xff]
    %v81 = vld [vmem:[%s3 + $0x8] sm:$0xff]
    %v82 = vld [vmem:[%s3 + $0x10] sm:$0xff]
    %v83 = vld [vmem:[%s3 + $0x18] sm:$0xff]
    %v84 = vld [vmem:[%s3 + $0x20] sm:$0xff]
    %v85 = vld [vmem:[%s3 + $0x28] sm:$0xff]
    %v86 = vld [vmem:[%s3 + $0x30] sm:$0xff]
    %v87 = vld [vmem:[%s3 + $0x38] sm:$0xff]
    %v88 = vld [vmem:[%s3 + $0x40] sm:$0xff]
    %v89 = vld [vmem:[%s3 + $0x48] sm:$0xff]
    %v90 = vld [vmem:[%s3 + $0x50] sm:$0xff]
    %v91 = vld [vmem:[%s3 + $0x58] sm:$0xff]
    %v92 = vld [vmem:[%s3 + $0x60] sm:$0xff]
    %v93 = vld [vmem:[%s3 + $0x68] sm:$0xff]
    %v94 = vld [vmem:[%s3 + $0x70] sm:$0xff]
    %v95 = vld [vmem:[%s3 + $0x78] sm:$0xff]
    %v96 = vld [vmem:[%s4] sm:$0x1]
    %98 = vset.pattern.permute.xlu0 0
    %99 = vperm.xlu0 %98, %v80
    %v100 = vpop.permute.xlu0 %99
    %103 = vset.pattern.permute.xlu0 0
    %104 = vperm.xlu0 %103, %v81
    %v105 = vpop.permute.xlu0 %104
    %108 = vset.pattern.permute.xlu0 0
    %109 = vperm.xlu0 %108, %v82
    %v110 = vpop.permute.xlu0 %109
    %113 = vset.pattern.permute.xlu0 0
    %114 = vperm.xlu0 %113, %v83
    %v115 = vpop.permute.xlu0 %114
    %118 = vset.pattern.permute.xlu0 0
    %119 = vperm.xlu0 %118, %v84
    %v120 = vpop.permute.xlu0 %119
    %123 = vset.pattern.permute.xlu0 0
    %124 = vperm.xlu0 %123, %v85
    %v125 = vpop.permute.xlu0 %124
    %128 = vset.pattern.permute.xlu0 0
    %129 = vperm.xlu0 %128, %v86
    %v130 = vpop.permute.xlu0 %129
    %133 = vset.pattern.permute.xlu0 0
    %134 = vperm.xlu0 %133, %v87
    %v135 = vpop.permute.xlu0 %134
    %138 = vset.pattern.permute.xlu0 0
    %139 = vperm.xlu0 %138, %v88
    %v140 = vpop.permute.xlu0 %139
    %143 = vset.pattern.permute.xlu0 0
    %144 = vperm.xlu0 %143, %v89
    %v145 = vpop.permute.xlu0 %144
    %148 = vset.pattern.permute.xlu0 0
    %149 = vperm.xlu0 %148, %v90
    %v150 = vpop.permute.xlu0 %149
    %153 = vset.pattern.permute.xlu0 0
    %154 = vperm.xlu0 %153, %v91
    %v155 = vpop.permute.xlu0 %154
    %158 = vset.pattern.permute.xlu0 0
    %159 = vperm.xlu0 %158, %v92
    %v160 = vpop.permute.xlu0 %159
    %163 = vset.pattern.permute.xlu0 0
    %164 = vperm.xlu0 %163, %v93
    %v165 = vpop.permute.xlu0 %164
    %168 = vset.pattern.permute.xlu0 0
    %169 = vperm.xlu0 %168, %v94
    %v170 = vpop.permute.xlu0 %169
    %173 = vset.pattern.permute.xlu0 0
    %174 = vperm.xlu0 %173, %v95
    %v175 = vpop.permute.xlu0 %174
    %v178 = vlaneseq
    %v179 = vshrl.u32 %v178, 7
    %v180 = vsub.s32 0, %v179
    %v181 = vrot.slane %v96, %v180
    %v183 = vmul.f32 %v100, %v181
    %v184 = vmul.f32 %v105, %v181
    %v185 = vmul.f32 %v110, %v181
    %v186 = vmul.f32 %v115, %v181
    %v187 = vmul.f32 %v120, %v181
    %v188 = vmul.f32 %v125, %v181
    %v189 = vmul.f32 %v130, %v181
    %v190 = vmul.f32 %v135, %v181
    %v191 = vmul.f32 %v140, %v181
    %v192 = vmul.f32 %v145, %v181
    %v193 = vmul.f32 %v150, %v181
    %v194 = vmul.f32 %v155, %v181
    %v195 = vmul.f32 %v160, %v181
    %v196 = vmul.f32 %v165, %v181
    %v197 = vmul.f32 %v170, %v181
    %v198 = vmul.f32 %v175, %v181
    %v199 = vunpack.c.l.bf16 %v64
    %v200 = vunpack.c.l.bf16 %v65
    %v201 = vunpack.c.l.bf16 %v66
    %v202 = vunpack.c.l.bf16 %v67
    %v203 = vunpack.c.l.bf16 %v68
    %v204 = vunpack.c.l.bf16 %v69
    %v205 = vunpack.c.l.bf16 %v70
    %v206 = vunpack.c.l.bf16 %v71
    %v207 = vunpack.c.l.bf16 %v72
    %v208 = vunpack.c.l.bf16 %v73
    %v209 = vunpack.c.l.bf16 %v74
    %v210 = vunpack.c.l.bf16 %v75
    %v211 = vunpack.c.l.bf16 %v76
    %v212 = vunpack.c.l.bf16 %v77
    %v213 = vunpack.c.l.bf16 %v78
    %v214 = vunpack.c.l.bf16 %v79
    %v215 = vmul.f32 %v199, %v183
    %v216 = vmul.f32 %v200, %v184
    %v217 = vmul.f32 %v201, %v185
    %v218 = vmul.f32 %v202, %v186
    %v219 = vmul.f32 %v203, %v187
    %v220 = vmul.f32 %v204, %v188
    %v221 = vmul.f32 %v205, %v189
    %v222 = vmul.f32 %v206, %v190
    %v223 = vmul.f32 %v207, %v191
    %v224 = vmul.f32 %v208, %v192
    %v225 = vmul.f32 %v209, %v193
    %v226 = vmul.f32 %v210, %v194
    %v227 = vmul.f32 %v211, %v195
    %v228 = vmul.f32 %v212, %v196
    %v229 = vmul.f32 %v213, %v197
    %v230 = vmul.f32 %v214, %v198
    %v231 = vunpack.c.l.bf16 %v48
    %v232 = vunpack.c.l.bf16 %v49
    %v233 = vunpack.c.l.bf16 %v50
    %v234 = vunpack.c.l.bf16 %v51
    %v235 = vunpack.c.l.bf16 %v52
    %v236 = vunpack.c.l.bf16 %v53
    %v237 = vunpack.c.l.bf16 %v54
    %v238 = vunpack.c.l.bf16 %v55
    %v239 = vunpack.c.l.bf16 %v56
    %v240 = vunpack.c.l.bf16 %v57
    %v241 = vunpack.c.l.bf16 %v58
    %v242 = vunpack.c.l.bf16 %v59
    %v243 = vunpack.c.l.bf16 %v60
    %v244 = vunpack.c.l.bf16 %v61
    %v245 = vunpack.c.l.bf16 %v62
    %v246 = vunpack.c.l.bf16 %v63
    %v247 = vadd.f32 %v231, %v215
    %v248 = vadd.f32 %v232, %v216
    %v249 = vadd.f32 %v233, %v217
    %v250 = vadd.f32 %v234, %v218
    %v251 = vadd.f32 %v235, %v219
    %v252 = vadd.f32 %v236, %v220
    %v253 = vadd.f32 %v237, %v221
    %v254 = vadd.f32 %v238, %v222
    %v255 = vadd.f32 %v239, %v223
    %v256 = vadd.f32 %v240, %v224
    %v257 = vadd.f32 %v241, %v225
    %v258 = vadd.f32 %v242, %v226
    %v259 = vadd.f32 %v243, %v227
    %v260 = vadd.f32 %v244, %v228
    %v261 = vadd.f32 %v245, %v229
    %v262 = vadd.f32 %v246, %v230
    %v263 = vpack.c.bf16 %v248, %v247
    %v264 = vpack.c.bf16 %v250, %v249
    %v265 = vpack.c.bf16 %v252, %v251
    %v266 = vpack.c.bf16 %v254, %v253
    %v267 = vpack.c.bf16 %v256, %v255
    %v268 = vpack.c.bf16 %v258, %v257
    %v269 = vpack.c.bf16 %v260, %v259
    %v270 = vpack.c.bf16 %v262, %v261
    %v271 = vld [vmem:[#allocation5] sm:$0xff]
    %v272 = vld [vmem:[#allocation2] sm:$0xf]
    %273 = vmatprep.subr.bf16.mxu0 0
    %274 = vmatpush1.bf16.msra.mxu0 %v263
    %275 = vmatprep.subr.bf16.mxu0 0
    %276 = vmatpush1.bf16.msra.mxu0 %v264
    %277 = vmatprep.subr.bf16.mxu0 0
    %278 = vmatpush1.bf16.msra.mxu0 %v265
    %279 = vmatprep.subr.bf16.mxu0 0
    %280 = vmatpush1.bf16.msra.mxu0 %v266
    %281 = vmatprep.subr.bf16.mxu0 0
    %282 = vmatpush1.bf16.msra.mxu0 %v267
    %283 = vmatprep.subr.bf16.mxu0 0
    %284 = vmatpush1.bf16.msra.mxu0 %v268
    %285 = vmatprep.subr.bf16.mxu0 0
    %286 = vmatpush1.bf16.msra.mxu0 %v269
    %287 = vmatprep.subr.bf16.mxu0 0
    %288 = vmatpush1.bf16.msra.mxu0 %v270
    %289 = vmatprep.subr.bf16.mxu0 0
    %290 = vmatpush1.bf16.msra.mxu0 0
    %291 = vmatprep.subr.bf16.mxu0 0
    %292 = vmatpush1.bf16.msra.mxu0 0
    %293 = vmatprep.subr.bf16.mxu0 0
    %294 = vmatpush1.bf16.msra.mxu0 0
    %295 = vmatprep.subr.bf16.mxu0 0
    %296 = vmatpush1.bf16.msra.mxu0 0
    %297 = vmatprep.subr.bf16.mxu0 0
    %298 = vmatpush1.bf16.msra.mxu0 0
    %299 = vmatprep.subr.bf16.mxu0 0
    %300 = vmatpush1.bf16.msra.mxu0 0
    %301 = vmatprep.subr.bf16.mxu0 0
    %302 = vmatpush1.bf16.msra.mxu0 0
    %303 = vmatprep.subr.bf16.mxu0 0
    %304 = vmatpush1.bf16.msra.mxu0 0
    %305 = vmatprep.mubr.bf16.mxu0 0
    %306 = vmatmul.mubr.bf16.gmra.mrb[0].mxu0 %v272
    %v307 = vpop.f32.mrb[0].mxu0
    %v308 = vadd.f32 0.0, %v307
    %v309 = vpop.f32.mrb[0].mxu0
    %v310 = vpop.f32.mrb[0].mxu0
    %v311 = vpop.f32.mrb[0].mxu0
    %312 = vdwg.mxu0
    %v313 = vadd.f32 %v271, %v308
    %314 = vst [vmem:[#allocation5] sm:$0xff] %v313
    // Predicated region
    $region42: #{tpu_custom_call.1} parent=1 // pred_check
      %p315 = pneg %p43
    $region43: #{tpu_custom_call.1} parent=1 // pred_check_branch
      %317 = sbr.rel (%p315) target = $region45
    $region44: #{tpu_custom_call.1} parent=1 // pred_region
      %v318 = vld [vmem:[#allocation5] sm:$0xff]
      %v319 = vld [vmem:[%s5] sm:$0x1]
      %v320 = vld [vmem:[%s6] sm:$0x1]
      %v321 = vld [vmem:[%s7] sm:$0x1]
      %v322 = vmul.f32 %v320, %v321
      %v323 = vadd.f32 %v319, %v322
      %v325 = vlaneseq
      %v326 = vshrl.u32 %v325, 7
      %v327 = vsub.s32 0, %v326
      %v328 = vrot.slane %v323, %v327
      %v330 = vadd.f32 %v318, %v328
      %331 = vst [vmem:[#allocation5] sm:$0xff] %v330
    $region45: #{tpu_custom_call.1} parent=1 // pred_fallthru
      _
    // Predicated region
    $region46: #{tpu_custom_call.1} parent=1 // pred_check
      _
    $region47: #{tpu_custom_call.1} parent=1 // pred_check_branch
      %333 = sbr.rel (0) target = $region49
    $region48: #{tpu_custom_call.1} parent=1 // pred_region
      %s335 = ssub.s32 128, 128
      %336 = vsyncadd [#allocation4], %s335
      %s338 = sshll.u32 [#allocation5], 4
      %s339 = int_to_ptr.vmem [resolvable:$true] %s338
      %341 = dma.vmem_to_hbm [thread:$0]  %s339, 128, %s8, [#allocation4]
    $region49: #{tpu_custom_call.1} parent=1 // pred_fallthru
      _
    // Predicated region
    $region50: #{tpu_custom_call.1} parent=1 // pred_check
      _
    $region51: #{tpu_custom_call.1} parent=1 // pred_check_branch
      %343 = sbr.rel (0) target = $region53
    $region52: #{tpu_custom_call.1} parent=1 // pred_region
      %344 = dma.done [#allocation4], 128
    $region53: #{tpu_custom_call.1} parent=1 // pred_fallthru
      _
    %345 = vsyncpa [#allocation3], 1
    %346 = vsyncpa [#allocation4], 1

</llo_original>
